<compile_context>
chip_gen: v6e
topology: v6e:2x2x1
jax: 0.10.0
libtpu: 0.0.40
codegen_flags: <defaults>
</compile_context>

<pallas_src>
import jax
import jax.numpy as jnp
from jax.experimental import pallas as pl
from jax.experimental.pallas import tpu as pltpu


def _round_up(n, m):
    return ((n + m - 1) // m) * m


def _vmem_capacity_bytes():
    """Physical VMEM per TensorCore; conservative default if query fails."""
    try:
        return int(pltpu.get_tpu_info().vmem_capacity_bytes)
    except Exception:
        return 64 * 1024 * 1024  # safe for v7x; v5e/v6e have 128 MiB


def _vmem_need_bytes(tm, inP, tk, outP, n_w_buf, out_itemsize=4):
    """Rough VMEM footprint of one grid step's working set."""
    return (2 * tm * inP * 2                 # streamed bf16 x tiles (double-buffered)
            + n_w_buf * inP * tk * 2         # w1 chunk(s), bf16
            + n_w_buf * tk * 4               # b1 chunk(s), f32
            + n_w_buf * tk * outP * 2        # w2 chunk(s), bf16
            + outP * 4                       # b2, f32
            + 2 * tm * outP * out_itemsize   # streamed out tiles
            + tm * outP * 4                  # f32 accumulator scratch
            + tm * tk * 6)                   # f32 h + bf16 cast temp


def _pick_tm(B, block_m):
    """Batch tile: multiple of 8, <= block_m, low padding waste, and (when B
    allows) >= 2 grid steps for megacore sharding + DMA/compute overlap."""
    B8 = _round_up(B, 8)
    cap = min(block_m, B8)
    if B8 >= 16:
        cap = min(cap, _round_up(pl.cdiv(B8, 2), 8))
    best_tm, best_cost = 8, None
    for cand in range(8, cap + 1, 8):
        padded = _round_up(B8, cand)
        # cost = padded rows of real work + ~32-row-equivalents per grid step
        cost = padded + 32 * (padded // cand)
        if best_cost is None or cost <= best_cost:
            best_tm, best_cost = cand, cost
    return best_tm


def blcer_kernel(x_ref, w1_ref, b1_ref, w2_ref, b2_ref, o_ref, acc_ref):
    """grid = (batch_tiles, hidden_chunks).  fc1 chunk -> ReLU -> fc2 partial,
    accumulated over hidden chunks into an f32 scratch."""
    k = pl.program_id(1)

    @pl.when(k == 0)
    def _init():
        acc_ref[...] = jnp.zeros_like(acc_ref)

    # fc1 chunk: (tm, inP) @ (inP, tk) -> (tm, tk), f32 accumulation on MXU.
    h = jnp.dot(x_ref[...], w1_ref[...], preferred_element_type=jnp.float32)
    # Bias + ReLU in f32 on the VPU.
    h = jnp.maximum(h + b1_ref[...], 0.0)
    # fc2 partial: (tm, tk) @ (tk, outP), accumulated in f32.
    acc_ref[...] += jnp.dot(h.astype(w2_ref.dtype), w2_ref[...],
                            preferred_element_type=jnp.float32)

    @pl.when(k == pl.num_programs(1) - 1)
    def _finalize():
        o_ref[...] = (acc_ref[...] + b2_ref[...]).astype(o_ref.dtype)


def prepare_blcer_params(w1, b1, w2, b2, *, block_m=None,
                         mxu_dtype=jnp.bfloat16, max_hidden_chunk=None):
    """One-time (load-time) pad + transpose + cast of the PyTorch-layout
    weights, plus generation-aware tile-size selection."""
    hiddenN, inputN = w1.shape
    outputN, hiddenN2 = w2.shape
    assert hiddenN2 == hiddenN

    inP = _round_up(inputN, 128)
    outP = _round_up(outputN, 128)
    hidP = _round_up(hiddenN, 128)

    capacity = _vmem_capacity_bytes()
    vmem_cap = (capacity * 7) // 8          # ~56 MiB on v7x, ~112 MiB on v5e/v6e
    if block_m is None:
        block_m = 512 if capacity >= 96 * (1 << 20) else 256
    data_budget = (vmem_cap * 3) // 4       # headroom for compiler temps/spills

    # Hidden-dim chunking: VMEM-resident weights (single-buffered, constant
    # index_map) when they fit; otherwise stream (tk)-wide hidden chunks
    # (double-buffered) and accumulate fc2 into the f32 scratch.
    tk, n_w_buf = hidP, 1
    if _vmem_need_bytes(block_m, inP, tk, outP, 1) > data_budget:
        n_w_buf = 2
        tk = 128
        while (2 * tk <= hidP and
               _vmem_need_bytes(block_m, inP, 2 * tk, outP, 2) <= data_budget):
            tk *= 2
        while (_vmem_need_bytes(block_m, inP, tk, outP, 2) > data_budget
               and block_m > 64):
            block_m //= 2
        # TODO(synk): for inputN/outputN so large that even tk=128 / tm=64
        # overflows VMEM, also tile the input / output feature dims.
    if max_hidden_chunk is not None and max_hidden_chunk < tk:
        tk = max(128, _round_up(max_hidden_chunk, 128))
        n_w_buf = 2
    hidP = _round_up(hidP, tk)              # hidden chunks divide evenly

    # Pad + transpose to [K, N] + cast to the MXU dtype (zero padding is
    # semantics-preserving: padded hidden cols give ReLU(0)=0 and padded rows
    # of w2 are zero).
    w1_p = jnp.zeros((inP, hidP), mxu_dtype).at[:inputN, :hiddenN].set(
        w1.T.astype(mxu_dtype))
    w2_p = jnp.zeros((hidP, outP), mxu_dtype).at[:hiddenN, :outputN].set(
        w2.T.astype(mxu_dtype))
    b1_p = jnp.zeros((1, hidP), jnp.float32).at[0, :hiddenN].set(
        b1.astype(jnp.float32))
    b2_p = jnp.zeros((1, outP), jnp.float32).at[0, :outputN].set(
        b2.astype(jnp.float32))

    return dict(w1=w1_p, b1=b1_p, w2=w2_p, b2=b2_p,
                inputN=inputN, hiddenN=hiddenN, outputN=outputN,
                inP=inP, hidP=hidP, outP=outP,
                tk=tk, n_w_buf=n_w_buf, block_m=block_m,
                mxu_dtype=mxu_dtype, vmem_cap=vmem_cap)


def blcer_forward(x, params):
    """x: (B, inputN) -> (B, outputN), matching nn.Linear/ReLU/nn.Linear."""
    p = params
    B, inputN = x.shape
    assert inputN == p["inputN"]
    out_dtype = x.dtype
    inP, hidP, outP, tk = p["inP"], p["hidP"], p["outP"], p["tk"]
    nkc = hidP // tk

    tm = _pick_tm(B, p["block_m"])
    Bp = _round_up(_round_up(B, 8), tm)

    # Stream bf16 x tiles; skip the pad copy when the layout already matches.
    if Bp == B and inP == inputN:
        x_p = x if x.dtype == p["mxu_dtype"] else x.astype(p["mxu_dtype"])
    else:
        x_p = jnp.zeros((Bp, inP), p["mxu_dtype"]).at[:B, :inputN].set(
            x.astype(p["mxu_dtype"]))

    grid = (Bp // tm, nkc)
    n_batch_tiles = Bp // tm

    need = _vmem_need_bytes(tm, inP, tk, outP, p["n_w_buf"],
                            jnp.dtype(out_dtype).itemsize)
    vmem_limit = int(min(max(need + need // 4, 16 * (1 << 20)), p["vmem_cap"]))

    weight_bytes = (inP * hidP + hidP * outP) * 2 + (hidP + outP) * 4
    bytes_accessed = int(Bp * inP * 2
                         + (weight_bytes if nkc == 1
                            else weight_bytes * n_batch_tiles)
                         + Bp * outP * jnp.dtype(out_dtype).itemsize)
    flops = int(2 * Bp * (inP * hidP + hidP * outP))

    def call(single_buffer_consts):
        def wspec(shape, index_map):
            # Weights/biases have a constant (or k-only) index map; when they
            # are fully VMEM-resident (nkc == 1) single-buffer them to halve
            # the resident footprint (critical on v7x's 64 MiB VMEM).
            if single_buffer_consts:
                return pl.BlockSpec(shape, index_map,
                                    pipeline_mode=pl.Buffered(1))
            return pl.BlockSpec(shape, index_map)

        return pl.pallas_call(
            blcer_kernel,
            out_shape=jax.ShapeDtypeStruct((Bp, outP), out_dtype),
            grid=grid,
            in_specs=[
                pl.BlockSpec((tm, inP), lambda i, k: (i, 0)),   # x: streamed
                wspec((inP, tk), lambda i, k: (0, k)),          # w1
                wspec((1, tk), lambda i, k: (0, k)),            # b1
                wspec((tk, outP), lambda i, k: (k, 0)),         # w2
                wspec((1, outP), lambda i, k: (0, 0)),          # b2
            ],
            out_specs=pl.BlockSpec((tm, outP), lambda i, k: (i, 0)),
            scratch_shapes=[pltpu.VMEM((tm, outP), jnp.float32)],
            compiler_params=pltpu.CompilerParams(
                dimension_semantics=("parallel", "arbitrary"),
                vmem_limit_bytes=vmem_limit),
            cost_estimate=pl.CostEstimate(
                flops=flops, transcendentals=0,
                bytes_accessed=bytes_accessed),
        )(x_p, p["w1"], p["b1"], p["w2"], p["b2"])

    use_single_buffer = (nkc == 1) and (p["n_w_buf"] == 1)
    try:
        out_p = call(use_single_buffer)
    except Exception:
        if not use_single_buffer:
            raise
        # pl.Buffered(1) not supported on this jax build: fall back to default
        # double-buffering (VMEM footprint only; numerics identical).
        out_p = call(False)

    # Slice off batch / lane padding.
    return out_p[:B, :p["outputN"]]


def blcer_apply(x, w1, b1, w2, b2, **kwargs):
    """Convenience one-shot wrapper (prefer prepare_blcer_params once +
    blcer_forward per call in real use)."""
    return blcer_forward(x, prepare_blcer_params(w1, b1, w2, b2, **kwargs))


def _make_params(key, inputN, hiddenN, outputN):
    kw1, kb1, kw2, kb2 = jax.random.split(key, 4)
    bound1 = 1.0 / (inputN ** 0.5)
    bound2 = 1.0 / (hiddenN ** 0.5)
    w1 = jax.random.uniform(kw1, (hiddenN, inputN), jnp.float32, -bound1, bound1)
    b1 = jax.random.uniform(kb1, (hiddenN,), jnp.float32, -bound1, bound1)
    w2 = jax.random.uniform(kw2, (outputN, hiddenN), jnp.float32, -bound2, bound2)
    b2 = jax.random.uniform(kb2, (outputN,), jnp.float32, -bound2, bound2)
    return w1, b1, w2, b2


def _check(out, x, w1, b1, w2, b2, bf16_tol, f32_tol):
    # Reference 1: same bf16 MXU operands, f32 accumulation (tight check of
    # tiling / padding / chunked accumulation / bias / ReLU plumbing).
    xb, w1b, w2b = x.astype(jnp.bfloat16), w1.astype(jnp.bfloat16), w2.astype(jnp.bfloat16)
    h_ref = jnp.maximum(
        jnp.dot(xb, w1b.T, preferred_element_type=jnp.float32) + b1, 0.0)
    ref_bf16 = jnp.dot(h_ref.astype(jnp.bfloat16), w2b.T,
                       preferred_element_type=jnp.float32) + b2
    assert jnp.allclose(out, ref_bf16, atol=bf16_tol, rtol=bf16_tol), "bf16 ref mismatch"
    # Reference 2: full-f32 PyTorch-equivalent forward (loose: bf16 MXU operands).
    ref_f32 = jnp.maximum(x @ w1.T + b1, 0.0) @ w2.T + b2
    assert jnp.allclose(out, ref_f32, atol=f32_tol, rtol=f32_tol), "f32 ref mismatch"


if __name__ == "__main__":
    key = jax.random.PRNGKey(0)
    k1, k2, kx1, kx2 = jax.random.split(key, 4)

    # --- Test 1: small shapes, resident-weight (single hidden chunk) path ---
    B, inputN, hiddenN, outputN = 8, 32, 64, 16
    w1, b1, w2, b2 = _make_params(k1, inputN, hiddenN, outputN)
    x = jax.random.normal(kx1, (B, inputN), dtype=jnp.float32)

    params = prepare_blcer_params(w1, b1, w2, b2)
    out = jax.block_until_ready(blcer_forward(x, params))
    assert out.shape == (B, outputN)
    _check(out, x, w1, b1, w2, b2, bf16_tol=1e-3, f32_tol=5e-2)

    # --- Test 2: hidden-chunk streaming path (forced), multi batch tiles,
    #     non-128-multiple feature dims, batch padding ---
    B2, inputN2, hiddenN2, outputN2 = 24, 40, 256, 24
    w1s, b1s, w2s, b2s = _make_params(k2, inputN2, hiddenN2, outputN2)
    x2 = jax.random.normal(kx2, (B2, inputN2), dtype=jnp.float32)

    params_s = prepare_blcer_params(w1s, b1s, w2s, b2s, max_hidden_chunk=128)
    out2 = jax.block_until_ready(blcer_forward(x2, params_s))
    assert out2.shape == (B2, outputN2)
    _check(out2, x2, w1s, b1s, w2s, b2s, bf16_tol=2e-3, f32_tol=1e-1)

    print("KERNEL_OK")
</pallas_src>

<mosaic_0001>
module attributes {stable_mosaic.version = 11 : i64} {
  func.func @blcer_kernel(%arg0: i32, %arg1: i32, %arg2: memref<8x128xbf16, #tpu.memory_space<vmem>>, %arg3: memref<128x128xbf16, #tpu.memory_space<vmem>>, %arg4: memref<1x128xf32, #tpu.memory_space<vmem>>, %arg5: memref<128x128xbf16, #tpu.memory_space<vmem>>, %arg6: memref<1x128xf32, #tpu.memory_space<vmem>>, %arg7: memref<8x128xf32, #tpu.memory_space<vmem>>, %arg8: memref<8x128xf32, #tpu.memory_space<vmem>>) attributes {dimension_semantics = [#tpu.dimension_semantics<parallel>, #tpu.dimension_semantics<arbitrary>], iteration_bounds = array<i64: 1, 1>, scalar_prefetch = 0 : i64, scratch_operands = 1 : i64, tpu.core_type = #tpu.core_type<tc>, window_params = [{transform_indices = @transform_0, window_bounds = array<i64: 8, 128>}, {pipeline_mode = #tpu.pipeline_mode<synchronous>, transform_indices = @transform_1, window_bounds = array<i64: 128, 128>}, {pipeline_mode = #tpu.pipeline_mode<synchronous>, transform_indices = @transform_2, window_bounds = array<i64: 1, 128>}, {pipeline_mode = #tpu.pipeline_mode<synchronous>, transform_indices = @transform_3, window_bounds = array<i64: 128, 128>}, {pipeline_mode = #tpu.pipeline_mode<synchronous>, transform_indices = @transform_4, window_bounds = array<i64: 1, 128>}, {transform_indices = @transform_5, window_bounds = array<i64: 8, 128>}]} {
    %c0_i32 = arith.constant 0 : i32
    %0 = arith.cmpi eq, %arg1, %c0_i32 : i32
    %1 = arith.extui %0 : i1 to i32
    %c0_i32_0 = arith.constant 0 : i32
    %2 = arith.cmpi ne, %1, %c0_i32_0 : i32
    scf.if %2 {
      %cst_16 = arith.constant 0.000000e+00 : f32
      %20 = vector.broadcast %cst_16 : f32 to vector<8x128xf32>
      %c0_17 = arith.constant 0 : index
      %c0_18 = arith.constant 0 : index
      %21 = vector.load %arg8[%c0_17, %c0_18] : memref<8x128xf32, #tpu.memory_space<vmem>>, vector<8x128xf32>
      tpu.vector_store %arg8[%c0_17, %c0_18], %20 {strides = array<i32>} : memref<8x128xf32, #tpu.memory_space<vmem>>, vector<8x128xf32>,
    } else {
    }
    %c0 = arith.constant 0 : index
    %c0_1 = arith.constant 0 : index
    %3 = vector.load %arg2[%c0, %c0_1] : memref<8x128xbf16, #tpu.memory_space<vmem>>, vector<8x128xbf16>
    %c0_2 = arith.constant 0 : index
    %c0_3 = arith.constant 0 : index
    %4 = vector.load %arg3[%c0_2, %c0_3] : memref<128x128xbf16, #tpu.memory_space<vmem>>, vector<128x128xbf16>
    %cst = arith.constant dense<0.000000e+00> : vector<8x128xf32>
    %5 = tpu.matmul %3, %4, %cst {dimension_numbers = #tpu.dot_dimension_numbers<[1], [0], [0], [1], [0, 0, 1, 1], [], []>} : vector<8x128xbf16>, vector<128x128xbf16>, vector<8x128xf32> -> vector<8x128xf32>
    %c0_4 = arith.constant 0 : index
    %c0_5 = arith.constant 0 : index
    %6 = vector.load %arg4[%c0_4, %c0_5] : memref<1x128xf32, #tpu.memory_space<vmem>>, vector<1x128xf32>
    %7 = vector.broadcast %6 : vector<1x128xf32> to vector<8x128xf32>
    %8 = arith.addf %5, %7 : vector<8x128xf32>
    %cst_6 = arith.constant 0.000000e+00 : f32
    %9 = vector.broadcast %cst_6 : f32 to vector<8x128xf32>
    %10 = arith.maximumf %8, %9 : vector<8x128xf32>
    %c0_7 = arith.constant 0 : index
    %c0_8 = arith.constant 0 : index
    %11 = vector.load %arg8[%c0_7, %c0_8] : memref<8x128xf32, #tpu.memory_space<vmem>>, vector<8x128xf32>
    %12 = arith.truncf %10 : vector<8x128xf32> to vector<8x128xbf16>
    %c0_9 = arith.constant 0 : index
    %c0_10 = arith.constant 0 : index
    %13 = vector.load %arg5[%c0_9, %c0_10] : memref<128x128xbf16, #tpu.memory_space<vmem>>, vector<128x128xbf16>
    %cst_11 = arith.constant dense<0.000000e+00> : vector<8x128xf32>
    %14 = tpu.matmul %12, %13, %cst_11 {dimension_numbers = #tpu.dot_dimension_numbers<[1], [0], [0], [1], [0, 0, 1, 1], [], []>} : vector<8x128xbf16>, vector<128x128xbf16>, vector<8x128xf32> -> vector<8x128xf32>
    %15 = arith.addf %11, %14 : vector<8x128xf32>
    %c0_12 = arith.constant 0 : index
    %c0_13 = arith.constant 0 : index
    %16 = vector.load %arg8[%c0_12, %c0_13] : memref<8x128xf32, #tpu.memory_space<vmem>>, vector<8x128xf32>
    tpu.vector_store %arg8[%c0_12, %c0_13], %15 {strides = array<i32>} : memref<8x128xf32, #tpu.memory_space<vmem>>, vector<8x128xf32>,
    %c0_i32_14 = arith.constant 0 : i32
    %17 = arith.cmpi eq, %arg1, %c0_i32_14 : i32
    %18 = arith.extui %17 : i1 to i32
    %c0_i32_15 = arith.constant 0 : i32
    %19 = arith.cmpi ne, %18, %c0_i32_15 : i32
    scf.if %19 {
      %c0_16 = arith.constant 0 : index
      %c0_17 = arith.constant 0 : index
      %20 = vector.load %arg8[%c0_16, %c0_17] : memref<8x128xf32, #tpu.memory_space<vmem>>, vector<8x128xf32>
      %c0_18 = arith.constant 0 : index
      %c0_19 = arith.constant 0 : index
      %21 = vector.load %arg6[%c0_18, %c0_19] : memref<1x128xf32, #tpu.memory_space<vmem>>, vector<1x128xf32>
      %22 = vector.broadcast %21 : vector<1x128xf32> to vector<8x128xf32>
      %23 = arith.addf %20, %22 : vector<8x128xf32>
      %c0_20 = arith.constant 0 : index
      %c0_21 = arith.constant 0 : index
      %24 = vector.load %arg7[%c0_20, %c0_21] : memref<8x128xf32, #tpu.memory_space<vmem>>, vector<8x128xf32>
      tpu.vector_store %arg7[%c0_20, %c0_21], %23 {strides = array<i32>} : memref<8x128xf32, #tpu.memory_space<vmem>>, vector<8x128xf32>,
    } else {
    }
    return
  }
  func.func @transform_0(%arg0: i32, %arg1: i32) -> (i32, i32) {
    %c0_i32 = arith.constant 0 : i32
    %c0_i32_0 = arith.constant 0 : i32
    return %arg0, %c0_i32 : i32, i32
  }
  func.func @transform_1(%arg0: i32, %arg1: i32) -> (i32, i32) {
    %c0_i32 = arith.constant 0 : i32
    %c0_i32_0 = arith.constant 0 : i32
    return %c0_i32, %arg1 : i32, i32
  }
  func.func @transform_2(%arg0: i32, %arg1: i32) -> (i32, i32) {
    %c0_i32 = arith.constant 0 : i32
    %c0_i32_0 = arith.constant 0 : i32
    return %c0_i32, %arg1 : i32, i32
  }
  func.func @transform_3(%arg0: i32, %arg1: i32) -> (i32, i32) {
    %c0_i32 = arith.constant 0 : i32
    %c0_i32_0 = arith.constant 0 : i32
    return %arg1, %c0_i32 : i32, i32
  }
  func.func @transform_4(%arg0: i32, %arg1: i32) -> (i32, i32) {
    %c0_i32 = arith.constant 0 : i32
    %c0_i32_0 = arith.constant 0 : i32
    %c0_i32_1 = arith.constant 0 : i32
    return %c0_i32, %c0_i32_0 : i32, i32
  }
  func.func @transform_5(%arg0: i32, %arg1: i32) -> (i32, i32) {
    %c0_i32 = arith.constant 0 : i32
    %c0_i32_0 = arith.constant 0 : i32
    return %arg0, %c0_i32 : i32, i32
  }
}

module attributes {stable_mosaic.version = 11 : i64} {
  func.func @blcer_kernel(%arg0: i32, %arg1: i32, %arg2: memref<8x128xbf16, #tpu.memory_space<vmem>>, %arg3: memref<128x128xbf16, #tpu.memory_space<vmem>>, %arg4: memref<1x128xf32, #tpu.memory_space<vmem>>, %arg5: memref<128x128xbf16, #tpu.memory_space<vmem>>, %arg6: memref<1x128xf32, #tpu.memory_space<vmem>>, %arg7: memref<8x128xf32, #tpu.memory_space<vmem>>, %arg8: memref<8x128xf32, #tpu.memory_space<vmem>>) attributes {dimension_semantics = [#tpu.dimension_semantics<parallel>, #tpu.dimension_semantics<arbitrary>], iteration_bounds = array<i64: 1, 1>, scalar_prefetch = 0 : i64, scratch_operands = 1 : i64, tpu.core_type = #tpu.core_type<tc>, window_params = [{transform_indices = @transform_0, window_bounds = array<i64: 8, 128>}, {transform_indices = @transform_1, window_bounds = array<i64: 128, 128>}, {transform_indices = @transform_2, window_bounds = array<i64: 1, 128>}, {transform_indices = @transform_3, window_bounds = array<i64: 128, 128>}, {pipeline_mode = #tpu.pipeline_mode<synchronous>, transform_indices = @transform_4, window_bounds = array<i64: 1, 128>}, {transform_indices = @transform_5, window_bounds = array<i64: 8, 128>}]} {
    %c0_i32 = arith.constant 0 : i32
    %0 = arith.cmpi eq, %arg1, %c0_i32 : i32
    %1 = arith.extui %0 : i1 to i32
    %c0_i32_0 = arith.constant 0 : i32
    %2 = arith.cmpi ne, %1, %c0_i32_0 : i32
    scf.if %2 {
      %cst_16 = arith.constant 0.000000e+00 : f32
      %20 = vector.broadcast %cst_16 : f32 to vector<8x128xf32>
      %c0_17 = arith.constant 0 : index
      %c0_18 = arith.constant 0 : index
      %21 = vector.load %arg8[%c0_17, %c0_18] : memref<8x128xf32, #tpu.memory_space<vmem>>, vector<8x128xf32>
      tpu.vector_store %arg8[%c0_17, %c0_18], %20 {strides = array<i32>} : memref<8x128xf32, #tpu.memory_space<vmem>>, vector<8x128xf32>,
    } else {
    }
    %c0 = arith.constant 0 : index
    %c0_1 = arith.constant 0 : index
    %3 = vector.load %arg2[%c0, %c0_1] : memref<8x128xbf16, #tpu.memory_space<vmem>>, vector<8x128xbf16>
    %c0_2 = arith.constant 0 : index
    %c0_3 = arith.constant 0 : index
    %4 = vector.load %arg3[%c0_2, %c0_3] : memref<128x128xbf16, #tpu.memory_space<vmem>>, vector<128x128xbf16>
    %cst = arith.constant dense<0.000000e+00> : vector<8x128xf32>
    %5 = tpu.matmul %3, %4, %cst {dimension_numbers = #tpu.dot_dimension_numbers<[1], [0], [0], [1], [0, 0, 1, 1], [], []>} : vector<8x128xbf16>, vector<128x128xbf16>, vector<8x128xf32> -> vector<8x128xf32>
    %c0_4 = arith.constant 0 : index
    %c0_5 = arith.constant 0 : index
    %6 = vector.load %arg4[%c0_4, %c0_5] : memref<1x128xf32, #tpu.memory_space<vmem>>, vector<1x128xf32>
    %7 = vector.broadcast %6 : vector<1x128xf32> to vector<8x128xf32>
    %8 = arith.addf %5, %7 : vector<8x128xf32>
    %cst_6 = arith.constant 0.000000e+00 : f32
    %9 = vector.broadcast %cst_6 : f32 to vector<8x128xf32>
    %10 = arith.maximumf %8, %9 : vector<8x128xf32>
    %c0_7 = arith.constant 0 : index
    %c0_8 = arith.constant 0 : index
    %11 = vector.load %arg8[%c0_7, %c0_8] : memref<8x128xf32, #tpu.memory_space<vmem>>, vector<8x128xf32>
    %12 = arith.truncf %10 : vector<8x128xf32> to vector<8x128xbf16>
    %c0_9 = arith.constant 0 : index
    %c0_10 = arith.constant 0 : index
    %13 = vector.load %arg5[%c0_9, %c0_10] : memref<128x128xbf16, #tpu.memory_space<vmem>>, vector<128x128xbf16>
    %cst_11 = arith.constant dense<0.000000e+00> : vector<8x128xf32>
    %14 = tpu.matmul %12, %13, %cst_11 {dimension_numbers = #tpu.dot_dimension_numbers<[1], [0], [0], [1], [0, 0, 1, 1], [], []>} : vector<8x128xbf16>, vector<128x128xbf16>, vector<8x128xf32> -> vector<8x128xf32>
    %15 = arith.addf %11, %14 : vector<8x128xf32>
    %c0_12 = arith.constant 0 : index
    %c0_13 = arith.constant 0 : index
    %16 = vector.load %arg8[%c0_12, %c0_13] : memref<8x128xf32, #tpu.memory_space<vmem>>, vector<8x128xf32>
    tpu.vector_store %arg8[%c0_12, %c0_13], %15 {strides = array<i32>} : memref<8x128xf32, #tpu.memory_space<vmem>>, vector<8x128xf32>,
    %c0_i32_14 = arith.constant 0 : i32
    %17 = arith.cmpi eq, %arg1, %c0_i32_14 : i32
    %18 = arith.extui %17 : i1 to i32
    %c0_i32_15 = arith.constant 0 : i32
    %19 = arith.cmpi ne, %18, %c0_i32_15 : i32
    scf.if %19 {
      %c0_16 = arith.constant 0 : index
      %c0_17 = arith.constant 0 : index
      %20 = vector.load %arg8[%c0_16, %c0_17] : memref<8x128xf32, #tpu.memory_space<vmem>>, vector<8x128xf32>
      %c0_18 = arith.constant 0 : index
      %c0_19 = arith.constant 0 : index
      %21 = vector.load %arg6[%c0_18, %c0_19] : memref<1x128xf32, #tpu.memory_space<vmem>>, vector<1x128xf32>
      %22 = vector.broadcast %21 : vector<1x128xf32> to vector<8x128xf32>
      %23 = arith.addf %20, %22 : vector<8x128xf32>
      %c0_20 = arith.constant 0 : index
      %c0_21 = arith.constant 0 : index
      %24 = vector.load %arg7[%c0_20, %c0_21] : memref<8x128xf32, #tpu.memory_space<vmem>>, vector<8x128xf32>
      tpu.vector_store %arg7[%c0_20, %c0_21], %23 {strides = array<i32>} : memref<8x128xf32, #tpu.memory_space<vmem>>, vector<8x128xf32>,
    } else {
    }
    return
  }
  func.func @transform_0(%arg0: i32, %arg1: i32) -> (i32, i32) {
    %c0_i32 = arith.constant 0 : i32
    %c0_i32_0 = arith.constant 0 : i32
    return %arg0, %c0_i32 : i32, i32
  }
  func.func @transform_1(%arg0: i32, %arg1: i32) -> (i32, i32) {
    %c0_i32 = arith.constant 0 : i32
    %c0_i32_0 = arith.constant 0 : i32
    return %c0_i32, %arg1 : i32, i32
  }
  func.func @transform_2(%arg0: i32, %arg1: i32) -> (i32, i32) {
    %c0_i32 = arith.constant 0 : i32
    %c0_i32_0 = arith.constant 0 : i32
    return %c0_i32, %arg1 : i32, i32
  }
  func.func @transform_3(%arg0: i32, %arg1: i32) -> (i32, i32) {
    %c0_i32 = arith.constant 0 : i32
    %c0_i32_0 = arith.constant 0 : i32
    return %arg1, %c0_i32 : i32, i32
  }
  func.func @transform_4(%arg0: i32, %arg1: i32) -> (i32, i32) {
    %c0_i32 = arith.constant 0 : i32
    %c0_i32_0 = arith.constant 0 : i32
    %c0_i32_1 = arith.constant 0 : i32
    return %c0_i32, %c0_i32_0 : i32, i32
  }
  func.func @transform_5(%arg0: i32, %arg1: i32) -> (i32, i32) {
    %c0_i32 = arith.constant 0 : i32
    %c0_i32_0 = arith.constant 0 : i32
    return %arg0, %c0_i32 : i32, i32
  }
}

</mosaic_0001>

<llo_original>
// kernel: tpu_custom_call.1
$region0: #{tpu_custom_call.1}
  #allocation0 [shape = 'u32[]', space=smem, size = 0x4, offset = 0x4, fixed_abs, tag = 'smem constant byte address 0x4 - core index']
  #allocation1 [shape = 'u32[144,128]{1,0:T(1,128)}', space=vmem, size = 0x12000, scoped, tag = 'internal scratch']
  #allocation2 [shape = 'f32[8,128]{1,0:T(8,128)}', space=vmem, size = 0x1000, scoped, tag = 'scratch operand']
  %s0 = inlined_call_operand.hbm [shape: bf16[8,128], index: 0, kind: input, shape index: {}]
  %s1 = inlined_call_operand.hbm [shape: bf16[128,128], index: 1, kind: input, shape index: {}]
  %s2 = inlined_call_operand.vmem [shape: f32[1,128], index: 2, kind: input, shape index: {}]
  %s3 = inlined_call_operand.hbm [shape: bf16[128,128], index: 3, kind: input, shape index: {}]
  %s4 = inlined_call_operand.vmem [shape: f32[1,128], index: 4, kind: input, shape index: {}]
  %s5 = inlined_call_operand.hbm [shape: f32[8,128], index: 5, kind: output, shape index: {}]
  %s6 = sld [smem:[#allocation0]]
  $region50: #{tpu_custom_call.1} parent=0
    _
  %s8 = ssub.s32 1, %s6
  %s9 = scalar_select 0, %s8, %s6
  $region1: #{tpu_custom_call.1} parent=0
    #allocation3 [shape = 'u8[2048]{0}', space=vmem, size = 0x800, scoped, tag = 'input window, operand 0, single buffered']
    #allocation4 [shape = 's32[1]{0}', space=sflag, size = 0x4, scoped, tag = 'scoped memory for tpu_custom_call.1']
    #allocation5 [shape = 's32[1]{0}', space=sflag, size = 0x4, scoped, tag = 'scoped memory for tpu_custom_call.1']
    #allocation6 [shape = 'u8[32768]{0}', space=vmem, size = 0x8000, scoped, tag = 'input window, operand 1, single buffered']
    #allocation7 [shape = 's32[1]{0}', space=sflag, size = 0x4, scoped, tag = 'scoped memory for tpu_custom_call.1']
    #allocation8 [shape = 'u8[32768]{0}', space=vmem, size = 0x8000, scoped, tag = 'input window, operand 3, single buffered']
    #allocation9 [shape = 'u8[4096]{0}', space=vmem, size = 0x1000, scoped, tag = 'output window, operand 0, single buffered']
    %10 = vsyncpa [#allocation4], 0
    %11 = vsyncpa [#allocation7], 0
    %12 = vsyncpa [#allocation5], 0
    // Predicated region
    $region2: #{tpu_custom_call.1} parent=1 // pred_check
      _
    $region3: #{tpu_custom_call.1} parent=1 // pred_check_branch
      %14 = sbr.rel (0) target = $region5
    $region4: #{tpu_custom_call.1} parent=1 // pred_region
      %s16 = ssub.s32 64, 64
      %17 = vsyncadd [#allocation4], %s16
      %s19 = sshll.u32 [#allocation3], 4
      %s20 = int_to_ptr.vmem [resolvable:$true] %s19
      %22 = dma.hbm_to_vmem [thread:$0]  %s0, 64, %s20, [#allocation4]
    $region5: #{tpu_custom_call.1} parent=1 // pred_fallthru
      _
    // Predicated region
    $region6: #{tpu_custom_call.1} parent=1 // pred_check
      _
    $region7: #{tpu_custom_call.1} parent=1 // pred_check_branch
      %24 = sbr.rel (0) target = $region9
    $region8: #{tpu_custom_call.1} parent=1 // pred_region
      %s26 = ssub.s32 1024, 1024
      %27 = vsyncadd [#allocation7], %s26
      %s28 = sshll.u32 [#allocation6], 4
      %s29 = int_to_ptr.vmem [resolvable:$true] %s28
      %34 = dma.hbm_to_vmem [thread:$0]  %s1, 1024, %s29, [#allocation7], 64, 64, 4
    $region9: #{tpu_custom_call.1} parent=1 // pred_fallthru
      _
    // Predicated region
    $region10: #{tpu_custom_call.1} parent=1 // pred_check
      _
    $region11: #{tpu_custom_call.1} parent=1 // pred_check_branch
      %36 = sbr.rel (0) target = $region13
    $region12: #{tpu_custom_call.1} parent=1 // pred_region
      _
    $region13: #{tpu_custom_call.1} parent=1 // pred_fallthru
      _
    // Predicated region
    $region14: #{tpu_custom_call.1} parent=1 // pred_check
      _
    $region15: #{tpu_custom_call.1} parent=1 // pred_check_branch
      %38 = sbr.rel (0) target = $region17
    $region16: #{tpu_custom_call.1} parent=1 // pred_region
      %s40 = ssub.s32 1024, 1024
      %41 = vsyncadd [#allocation7], %s40
      %s42 = sshll.u32 [#allocation8], 4
      %s43 = int_to_ptr.vmem [resolvable:$true] %s42
      %48 = dma.hbm_to_vmem [thread:$0]  %s3, 1024, %s43, [#allocation7], 64, 64, 4
    $region17: #{tpu_custom_call.1} parent=1 // pred_fallthru
      _
    // Predicated region
    $region18: #{tpu_custom_call.1} parent=1 // pred_check
      _
    $region19: #{tpu_custom_call.1} parent=1 // pred_check_branch
      %50 = sbr.rel (0) target = $region21
    $region20: #{tpu_custom_call.1} parent=1 // pred_region
      _
    $region21: #{tpu_custom_call.1} parent=1 // pred_fallthru
      _
    // Predicated region
    $region22: #{tpu_custom_call.1} parent=1 // pred_check
      _
    $region23: #{tpu_custom_call.1} parent=1 // pred_check_branch
      %52 = sbr.rel (0) target = $region25
    $region24: #{tpu_custom_call.1} parent=1 // pred_region
      %53 = dma.done [#allocation4], 64
    $region25: #{tpu_custom_call.1} parent=1 // pred_fallthru
      _
    // Predicated region
    $region26: #{tpu_custom_call.1} parent=1 // pred_check
      _
    $region27: #{tpu_custom_call.1} parent=1 // pred_check_branch
      %55 = sbr.rel (0) target = $region29
    $region28: #{tpu_custom_call.1} parent=1 // pred_region
      %56 = dma.done [#allocation7], 1024
    $region29: #{tpu_custom_call.1} parent=1 // pred_fallthru
      _
    // Predicated region
    $region30: #{tpu_custom_call.1} parent=1 // pred_check
      _
    $region31: #{tpu_custom_call.1} parent=1 // pred_check_branch
      %58 = sbr.rel (0) target = $region33
    $region32: #{tpu_custom_call.1} parent=1 // pred_region
      %59 = dma.done [#allocation7], 1024
    $region33: #{tpu_custom_call.1} parent=1 // pred_fallthru
      _
    %p61 = scmp.eq.s32.totalorder 0, 0
    // Predicated region
    $region34: #{tpu_custom_call.1} parent=1 // pred_check
      %p62 = pneg %p61
    $region35: #{tpu_custom_call.1} parent=1 // pred_check_branch
      %64 = sbr.rel (%p62) target = $region37
    $region36: #{tpu_custom_call.1} parent=1 // pred_region
      %65 = vst [vmem:[#allocation2] sm:$0xff] 0.0
    $region37: #{tpu_custom_call.1} parent=1 // pred_fallthru
      _
    %v66 = vld [vmem:[#allocation3] sm:$0xf]
    %v67 = vld [vmem:[#allocation6] sm:$0xf]
    %v68 = vld [vmem:[#allocation6 + $0x4] sm:$0xf]
    %v69 = vld [vmem:[#allocation6 + $0x8] sm:$0xf]
    %v70 = vld [vmem:[#allocation6 + $0xc] sm:$0xf]
    %v71 = vld [vmem:[#allocation6 + $0x10] sm:$0xf]
    %v72 = vld [vmem:[#allocation6 + $0x14] sm:$0xf]
    %v73 = vld [vmem:[#allocation6 + $0x18] sm:$0xf]
    %v74 = vld [vmem:[#allocation6 + $0x1c] sm:$0xf]
    %v75 = vld [vmem:[#allocation6 + $0x20] sm:$0xf]
    %v76 = vld [vmem:[#allocation6 + $0x24] sm:$0xf]
    %v77 = vld [vmem:[#allocation6 + $0x28] sm:$0xf]
    %v78 = vld [vmem:[#allocation6 + $0x2c] sm:$0xf]
    %v79 = vld [vmem:[#allocation6 + $0x30] sm:$0xf]
    %v80 = vld [vmem:[#allocation6 + $0x34] sm:$0xf]
    %v81 = vld [vmem:[#allocation6 + $0x38] sm:$0xf]
    %v82 = vld [vmem:[#allocation6 + $0x3c] sm:$0xf]
    %v83 = vld [vmem:[%s2] sm:$0x1]
    %v85 = vlaneseq
    %v86 = vshrl.u32 %v85, 7
    %v87 = vsub.s32 0, %v86
    %v88 = vrot.slane %v83, %v87
    %v106 = vunpack.c.l.b16 %v67
    %v107 = vunpack.c.l.b16 %v68
    %v108 = vunpack.c.l.b16 %v69
    %v109 = vunpack.c.l.b16 %v70
    %v110 = vunpack.c.l.b16 %v71
    %v111 = vunpack.c.l.b16 %v72
    %v112 = vunpack.c.l.b16 %v73
    %v113 = vunpack.c.l.b16 %v74
    %v114 = vunpack.c.l.b16 %v75
    %v115 = vunpack.c.l.b16 %v76
    %v116 = vunpack.c.l.b16 %v77
    %v117 = vunpack.c.l.b16 %v78
    %v118 = vunpack.c.l.b16 %v79
    %v119 = vunpack.c.l.b16 %v80
    %v120 = vunpack.c.l.b16 %v81
    %v121 = vunpack.c.l.b16 %v82
    %v122 = vpack.c.b16 %v107, %v106
    %v123 = vpack.c.b16 %v109, %v108
    %v124 = vpack.c.b16 %v111, %v110
    %v125 = vpack.c.b16 %v113, %v112
    %v126 = vpack.c.b16 %v115, %v114
    %v127 = vpack.c.b16 %v117, %v116
    %v128 = vpack.c.b16 %v119, %v118
    %v129 = vpack.c.b16 %v121, %v120
    %138 = vmatprep.subr.bf16.mxu0 0
    %139 = vmatpush1.bf16.msra.mxu0 %v129
    %140 = vmatprep.subr.bf16.mxu0 0
    %141 = vmatpush1.bf16.msra.mxu0 %v128
    %142 = vmatprep.subr.bf16.mxu0 0
    %143 = vmatpush1.bf16.msra.mxu0 %v127
    %144 = vmatprep.subr.bf16.mxu0 0
    %145 = vmatpush1.bf16.msra.mxu0 %v126
    %146 = vmatprep.subr.bf16.mxu0 0
    %147 = vmatpush1.bf16.msra.mxu0 %v125
    %148 = vmatprep.subr.bf16.mxu0 0
    %149 = vmatpush1.bf16.msra.mxu0 %v124
    %150 = vmatprep.subr.bf16.mxu0 0
    %151 = vmatpush1.bf16.msra.mxu0 %v123
    %152 = vmatprep.subr.bf16.mxu0 0
    %153 = vmatpush1.bf16.msra.mxu0 %v122
    %154 = vmatprep.subr.bf16.mxu0 0
    %155 = vmatpush2.bf16.msra.mxu0 0
    %156 = vmatprep.subr.bf16.mxu0 0
    %157 = vmatpush2.bf16.msra.mxu0 0
    %158 = vmatprep.subr.bf16.mxu0 0
    %159 = vmatpush2.bf16.msra.mxu0 0
    %160 = vmatprep.subr.bf16.mxu0 0
    %161 = vmatpush2.bf16.msra.mxu0 0
    %162 = vmatprep.subr.bf16.mxu0 0
    %163 = vmatpush2.bf16.msra.mxu0 0
    %164 = vmatprep.subr.bf16.mxu0 0
    %165 = vmatpush2.bf16.msra.mxu0 0
    %166 = vmatprep.subr.bf16.mxu0 0
    %167 = vmatpush2.bf16.msra.mxu0 0
    %168 = vmatprep.subr.bf16.mxu0 0
    %169 = vmatpush2.bf16.msra.mxu0 0
    %170 = vmatprep.mubr.bf16.mxu0 0
    %171 = vmatmul.mubr.bf16.gmra.mxu0 %v66
    %v172 = vpop.f32.mrf.mxu0
    %v173 = vadd.f32 %v88, %v172
    %v174 = vpop.f32.mrf.mxu0
    %v175 = vpop.f32.mrf.mxu0
    %v176 = vpop.f32.mrf.mxu0
    %177 = vdwg.mxu0
    %v178 = vmax.f32 %v173, 0.0
    %v179 = vld [vmem:[#allocation2] sm:$0xff]
    %v180 = vpack.c.bf16 %v178, %v178
    %v181 = vld [vmem:[#allocation8] sm:$0xf]
    %v182 = vld [vmem:[#allocation8 + $0x4] sm:$0xf]
    %v183 = vld [vmem:[#allocation8 + $0x8] sm:$0xf]
    %v184 = vld [vmem:[#allocation8 + $0xc] sm:$0xf]
    %v185 = vld [vmem:[#allocation8 + $0x10] sm:$0xf]
    %v186 = vld [vmem:[#allocation8 + $0x14] sm:$0xf]
    %v187 = vld [vmem:[#allocation8 + $0x18] sm:$0xf]
    %v188 = vld [vmem:[#allocation8 + $0x1c] sm:$0xf]
    %v189 = vld [vmem:[#allocation8 + $0x20] sm:$0xf]
    %v190 = vld [vmem:[#allocation8 + $0x24] sm:$0xf]
    %v191 = vld [vmem:[#allocation8 + $0x28] sm:$0xf]
    %v192 = vld [vmem:[#allocation8 + $0x2c] sm:$0xf]
    %v193 = vld [vmem:[#allocation8 + $0x30] sm:$0xf]
    %v194 = vld [vmem:[#allocation8 + $0x34] sm:$0xf]
    %v195 = vld [vmem:[#allocation8 + $0x38] sm:$0xf]
    %v196 = vld [vmem:[#allocation8 + $0x3c] sm:$0xf]
    %v213 = vunpack.c.l.b16 %v181
    %v214 = vunpack.c.l.b16 %v182
    %v215 = vunpack.c.l.b16 %v183
    %v216 = vunpack.c.l.b16 %v184
    %v217 = vunpack.c.l.b16 %v185
    %v218 = vunpack.c.l.b16 %v186
    %v219 = vunpack.c.l.b16 %v187
    %v220 = vunpack.c.l.b16 %v188
    %v221 = vunpack.c.l.b16 %v189
    %v222 = vunpack.c.l.b16 %v190
    %v223 = vunpack.c.l.b16 %v191
    %v224 = vunpack.c.l.b16 %v192
    %v225 = vunpack.c.l.b16 %v193
    %v226 = vunpack.c.l.b16 %v194
    %v227 = vunpack.c.l.b16 %v195
    %v228 = vunpack.c.l.b16 %v196
    %v229 = vpack.c.b16 %v214, %v213
    %v230 = vpack.c.b16 %v216, %v215
    %v231 = vpack.c.b16 %v218, %v217
    %v232 = vpack.c.b16 %v220, %v219
    %v233 = vpack.c.b16 %v222, %v221
    %v234 = vpack.c.b16 %v224, %v223
    %v235 = vpack.c.b16 %v226, %v225
    %v236 = vpack.c.b16 %v228, %v227
    %245 = vmatprep.subr.bf16.mxu0 0
    %246 = vmatpush1.bf16.msra.mxu0 %v236
    %247 = vmatprep.subr.bf16.mxu0 0
    %248 = vmatpush1.bf16.msra.mxu0 %v235
    %249 = vmatprep.subr.bf16.mxu0 0
    %250 = vmatpush1.bf16.msra.mxu0 %v234
    %251 = vmatprep.subr.bf16.mxu0 0
    %252 = vmatpush1.bf16.msra.mxu0 %v233
    %253 = vmatprep.subr.bf16.mxu0 0
    %254 = vmatpush1.bf16.msra.mxu0 %v232
    %255 = vmatprep.subr.bf16.mxu0 0
    %256 = vmatpush1.bf16.msra.mxu0 %v231
    %257 = vmatprep.subr.bf16.mxu0 0
    %258 = vmatpush1.bf16.msra.mxu0 %v230
    %259 = vmatprep.subr.bf16.mxu0 0
    %260 = vmatpush1.bf16.msra.mxu0 %v229
    %261 = vmatprep.subr.bf16.mxu0 0
    %262 = vmatpush2.bf16.msra.mxu0 0
    %263 = vmatprep.subr.bf16.mxu0 0
    %264 = vmatpush2.bf16.msra.mxu0 0
    %265 = vmatprep.subr.bf16.mxu0 0
    %266 = vmatpush2.bf16.msra.mxu0 0
    %267 = vmatprep.subr.bf16.mxu0 0
    %268 = vmatpush2.bf16.msra.mxu0 0
    %269 = vmatprep.subr.bf16.mxu0 0
    %270 = vmatpush2.bf16.msra.mxu0 0
    %271 = vmatprep.subr.bf16.mxu0 0
    %272 = vmatpush2.bf16.msra.mxu0 0
    %273 = vmatprep.subr.bf16.mxu0 0
    %274 = vmatpush2.bf16.msra.mxu0 0
    %275 = vmatprep.subr.bf16.mxu0 0
    %276 = vmatpush2.bf16.msra.mxu0 0
    %277 = vmatprep.mubr.bf16.mxu0 0
    %278 = vmatmul.mubr.bf16.gmra.mxu0 %v180
    %v279 = vpop.f32.mrf.mxu0
    %v280 = vadd.f32 0.0, %v279
    %v281 = vpop.f32.mrf.mxu0
    %v282 = vpop.f32.mrf.mxu0
    %v283 = vpop.f32.mrf.mxu0
    %284 = vdwg.mxu0
    %v285 = vadd.f32 %v179, %v280
    %286 = vst [vmem:[#allocation2] sm:$0xff] %v285
    // Predicated region
    $region38: #{tpu_custom_call.1} parent=1 // pred_check
      %p287 = pneg %p61
    $region39: #{tpu_custom_call.1} parent=1 // pred_check_branch
      %289 = sbr.rel (%p287) target = $region41
    $region40: #{tpu_custom_call.1} parent=1 // pred_region
      %v290 = vld [vmem:[#allocation2] sm:$0xff]
      %v291 = vld [vmem:[%s4] sm:$0x1]
      %v293 = vlaneseq
      %v294 = vshrl.u32 %v293, 7
      %v295 = vsub.s32 0, %v294
      %v296 = vrot.slane %v291, %v295
      %v298 = vadd.f32 %v290, %v296
      %299 = vst [vmem:[#allocation9] sm:$0xff] %v298
    $region41: #{tpu_custom_call.1} parent=1 // pred_fallthru
      _
    // Predicated region
    $region42: #{tpu_custom_call.1} parent=1 // pred_check
      _
    $region43: #{tpu_custom_call.1} parent=1 // pred_check_branch
      %301 = sbr.rel (0) target = $region45
    $region44: #{tpu_custom_call.1} parent=1 // pred_region
      %s303 = ssub.s32 128, 128
      %304 = vsyncadd [#allocation5], %s303
      %s306 = sshll.u32 [#allocation9], 4
      %s307 = int_to_ptr.vmem [resolvable:$true] %s306
      %309 = dma.vmem_to_hbm [thread:$0]  %s307, 128, %s5, [#allocation5]
    $region45: #{tpu_custom_call.1} parent=1 // pred_fallthru
      _
    // Predicated region
    $region46: #{tpu_custom_call.1} parent=1 // pred_check
      _
    $region47: #{tpu_custom_call.1} parent=1 // pred_check_branch
      %311 = sbr.rel (0) target = $region49
    $region48: #{tpu_custom_call.1} parent=1 // pred_region
      %312 = dma.done [#allocation5], 128
    $region49: #{tpu_custom_call.1} parent=1 // pred_fallthru
      _
    %313 = vsyncpa [#allocation4], 1
    %314 = vsyncpa [#allocation7], 1
    %315 = vsyncpa [#allocation5], 1

// kernel: tpu_custom_call.1
$region0: #{tpu_custom_call.1}
  #allocation0 [shape = 'u32[]', space=smem, size = 0x4, offset = 0x4, fixed_abs, tag = 'smem constant byte address 0x4 - core index']
  #allocation1 [shape = 'u32[144,128]{1,0:T(1,128)}', space=vmem, size = 0x12000, scoped, tag = 'internal scratch']
  #allocation2 [shape = 'f32[8,128]{1,0:T(8,128)}', space=vmem, size = 0x1000, scoped, tag = 'scratch operand']
  %s0 = inlined_call_operand.hbm [shape: bf16[8,128], index: 0, kind: input, shape index: {}]
  %s1 = inlined_call_operand.hbm [shape: bf16[128,128], index: 1, kind: input, shape index: {}]
  %s2 = inlined_call_operand.vmem [shape: f32[1,128], index: 2, kind: input, shape index: {}]
  %s3 = inlined_call_operand.hbm [shape: bf16[128,128], index: 3, kind: input, shape index: {}]
  %s4 = inlined_call_operand.vmem [shape: f32[1,128], index: 4, kind: input, shape index: {}]
  %s5 = inlined_call_operand.hbm [shape: f32[8,128], index: 5, kind: output, shape index: {}]
  %s6 = sld [smem:[#allocation0]]
  $region50: #{tpu_custom_call.1} parent=0
    _
  %s8 = ssub.s32 1, %s6
  %s9 = scalar_select 0, %s8, %s6
  $region1: #{tpu_custom_call.1} parent=0
    #allocation3 [shape = 'u8[2048]{0}', space=vmem, size = 0x800, scoped, tag = 'input window, operand 0, single buffered']
    #allocation4 [shape = 's32[1]{0}', space=sflag, size = 0x4, scoped, tag = 'scoped memory for tpu_custom_call.1']
    #allocation5 [shape = 's32[1]{0}', space=sflag, size = 0x4, scoped, tag = 'scoped memory for tpu_custom_call.1']
    #allocation6 [shape = 'u8[32768]{0}', space=vmem, size = 0x8000, scoped, tag = 'input window, operand 1, single buffered']
    #allocation7 [shape = 's32[1]{0}', space=sflag, size = 0x4, scoped, tag = 'scoped memory for tpu_custom_call.1']
    #allocation8 [shape = 'u8[32768]{0}', space=vmem, size = 0x8000, scoped, tag = 'input window, operand 3, single buffered']
    #allocation9 [shape = 'u8[4096]{0}', space=vmem, size = 0x1000, scoped, tag = 'output window, operand 0, single buffered']
    %10 = vsyncpa [#allocation4], 0
    %11 = vsyncpa [#allocation7], 0
    %12 = vsyncpa [#allocation5], 0
    // Predicated region
    $region2: #{tpu_custom_call.1} parent=1 // pred_check
      _
    $region3: #{tpu_custom_call.1} parent=1 // pred_check_branch
      %14 = sbr.rel (0) target = $region5
    $region4: #{tpu_custom_call.1} parent=1 // pred_region
      %s16 = ssub.s32 64, 64
      %17 = vsyncadd [#allocation4], %s16
      %s19 = sshll.u32 [#allocation3], 4
      %s20 = int_to_ptr.vmem [resolvable:$true] %s19
      %22 = dma.hbm_to_vmem [thread:$0]  %s0, 64, %s20, [#allocation4]
    $region5: #{tpu_custom_call.1} parent=1 // pred_fallthru
      _
    // Predicated region
    $region6: #{tpu_custom_call.1} parent=1 // pred_check
      _
    $region7: #{tpu_custom_call.1} parent=1 // pred_check_branch
      %24 = sbr.rel (0) target = $region9
    $region8: #{tpu_custom_call.1} parent=1 // pred_region
      %s26 = ssub.s32 1024, 1024
      %27 = vsyncadd [#allocation7], %s26
      %s28 = sshll.u32 [#allocation6], 4
      %s29 = int_to_ptr.vmem [resolvable:$true] %s28
      %34 = dma.hbm_to_vmem [thread:$0]  %s1, 1024, %s29, [#allocation7], 64, 64, 4
    $region9: #{tpu_custom_call.1} parent=1 // pred_fallthru
      _
    // Predicated region
    $region10: #{tpu_custom_call.1} parent=1 // pred_check
      _
    $region11: #{tpu_custom_call.1} parent=1 // pred_check_branch
      %36 = sbr.rel (0) target = $region13
    $region12: #{tpu_custom_call.1} parent=1 // pred_region
      _
    $region13: #{tpu_custom_call.1} parent=1 // pred_fallthru
      _
    // Predicated region
    $region14: #{tpu_custom_call.1} parent=1 // pred_check
      _
    $region15: #{tpu_custom_call.1} parent=1 // pred_check_branch
      %38 = sbr.rel (0) target = $region17
    $region16: #{tpu_custom_call.1} parent=1 // pred_region
      %s40 = ssub.s32 1024, 1024
      %41 = vsyncadd [#allocation7], %s40
      %s42 = sshll.u32 [#allocation8], 4
      %s43 = int_to_ptr.vmem [resolvable:$true] %s42
      %48 = dma.hbm_to_vmem [thread:$0]  %s3, 1024, %s43, [#allocation7], 64, 64, 4
    $region17: #{tpu_custom_call.1} parent=1 // pred_fallthru
      _
    // Predicated region
    $region18: #{tpu_custom_call.1} parent=1 // pred_check
      _
    $region19: #{tpu_custom_call.1} parent=1 // pred_check_branch
      %50 = sbr.rel (0) target = $region21
    $region20: #{tpu_custom_call.1} parent=1 // pred_region
      _
    $region21: #{tpu_custom_call.1} parent=1 // pred_fallthru
      _
    // Predicated region
    $region22: #{tpu_custom_call.1} parent=1 // pred_check
      _
    $region23: #{tpu_custom_call.1} parent=1 // pred_check_branch
      %52 = sbr.rel (0) target = $region25
    $region24: #{tpu_custom_call.1} parent=1 // pred_region
      %53 = dma.done [#allocation4], 64
    $region25: #{tpu_custom_call.1} parent=1 // pred_fallthru
      _
    // Predicated region
    $region26: #{tpu_custom_call.1} parent=1 // pred_check
      _
    $region27: #{tpu_custom_call.1} parent=1 // pred_check_branch
      %55 = sbr.rel (0) target = $region29
    $region28: #{tpu_custom_call.1} parent=1 // pred_region
      %56 = dma.done [#allocation7], 1024
    $region29: #{tpu_custom_call.1} parent=1 // pred_fallthru
      _
    // Predicated region
    $region30: #{tpu_custom_call.1} parent=1 // pred_check
      _
    $region31: #{tpu_custom_call.1} parent=1 // pred_check_branch
      %58 = sbr.rel (0) target = $region33
    $region32: #{tpu_custom_call.1} parent=1 // pred_region
      %59 = dma.done [#allocation7], 1024
    $region33: #{tpu_custom_call.1} parent=1 // pred_fallthru
      _
    %p61 = scmp.eq.s32.totalorder 0, 0
    // Predicated region
    $region34: #{tpu_custom_call.1} parent=1 // pred_check
      %p62 = pneg %p61
    $region35: #{tpu_custom_call.1} parent=1 // pred_check_branch
      %64 = sbr.rel (%p62) target = $region37
    $region36: #{tpu_custom_call.1} parent=1 // pred_region
      %65 = vst [vmem:[#allocation2] sm:$0xff] 0.0
    $region37: #{tpu_custom_call.1} parent=1 // pred_fallthru
      _
    %v66 = vld [vmem:[#allocation3] sm:$0xf]
    %v67 = vld [vmem:[#allocation6] sm:$0xf]
    %v68 = vld [vmem:[#allocation6 + $0x4] sm:$0xf]
    %v69 = vld [vmem:[#allocation6 + $0x8] sm:$0xf]
    %v70 = vld [vmem:[#allocation6 + $0xc] sm:$0xf]
    %v71 = vld [vmem:[#allocation6 + $0x10] sm:$0xf]
    %v72 = vld [vmem:[#allocation6 + $0x14] sm:$0xf]
    %v73 = vld [vmem:[#allocation6 + $0x18] sm:$0xf]
    %v74 = vld [vmem:[#allocation6 + $0x1c] sm:$0xf]
    %v75 = vld [vmem:[#allocation6 + $0x20] sm:$0xf]
    %v76 = vld [vmem:[#allocation6 + $0x24] sm:$0xf]
    %v77 = vld [vmem:[#allocation6 + $0x28] sm:$0xf]
    %v78 = vld [vmem:[#allocation6 + $0x2c] sm:$0xf]
    %v79 = vld [vmem:[#allocation6 + $0x30] sm:$0xf]
    %v80 = vld [vmem:[#allocation6 + $0x34] sm:$0xf]
    %v81 = vld [vmem:[#allocation6 + $0x38] sm:$0xf]
    %v82 = vld [vmem:[#allocation6 + $0x3c] sm:$0xf]
    %v83 = vld [vmem:[%s2] sm:$0x1]
    %v85 = vlaneseq
    %v86 = vshrl.u32 %v85, 7
    %v87 = vsub.s32 0, %v86
    %v88 = vrot.slane %v83, %v87
    %v106 = vunpack.c.l.b16 %v67
    %v107 = vunpack.c.l.b16 %v68
    %v108 = vunpack.c.l.b16 %v69
    %v109 = vunpack.c.l.b16 %v70
    %v110 = vunpack.c.l.b16 %v71
    %v111 = vunpack.c.l.b16 %v72
    %v112 = vunpack.c.l.b16 %v73
    %v113 = vunpack.c.l.b16 %v74
    %v114 = vunpack.c.l.b16 %v75
    %v115 = vunpack.c.l.b16 %v76
    %v116 = vunpack.c.l.b16 %v77
    %v117 = vunpack.c.l.b16 %v78
    %v118 = vunpack.c.l.b16 %v79
    %v119 = vunpack.c.l.b16 %v80
    %v120 = vunpack.c.l.b16 %v81
    %v121 = vunpack.c.l.b16 %v82
    %v122 = vpack.c.b16 %v107, %v106
    %v123 = vpack.c.b16 %v109, %v108
    %v124 = vpack.c.b16 %v111, %v110
    %v125 = vpack.c.b16 %v113, %v112
    %v126 = vpack.c.b16 %v115, %v114
    %v127 = vpack.c.b16 %v117, %v116
    %v128 = vpack.c.b16 %v119, %v118
    %v129 = vpack.c.b16 %v121, %v120
    %138 = vmatprep.subr.bf16.mxu0 0
    %139 = vmatpush1.bf16.msra.mxu0 %v129
    %140 = vmatprep.subr.bf16.mxu0 0
    %141 = vmatpush1.bf16.msra.mxu0 %v128
    %142 = vmatprep.subr.bf16.mxu0 0
    %143 = vmatpush1.bf16.msra.mxu0 %v127
    %144 = vmatprep.subr.bf16.mxu0 0
    %145 = vmatpush1.bf16.msra.mxu0 %v126
    %146 = vmatprep.subr.bf16.mxu0 0
    %147 = vmatpush1.bf16.msra.mxu0 %v125
    %148 = vmatprep.subr.bf16.mxu0 0
    %149 = vmatpush1.bf16.msra.mxu0 %v124
    %150 = vmatprep.subr.bf16.mxu0 0
    %151 = vmatpush1.bf16.msra.mxu0 %v123
    %152 = vmatprep.subr.bf16.mxu0 0
    %153 = vmatpush1.bf16.msra.mxu0 %v122
    %154 = vmatprep.subr.bf16.mxu0 0
    %155 = vmatpush2.bf16.msra.mxu0 0
    %156 = vmatprep.subr.bf16.mxu0 0
    %157 = vmatpush2.bf16.msra.mxu0 0
    %158 = vmatprep.subr.bf16.mxu0 0
    %159 = vmatpush2.bf16.msra.mxu0 0
    %160 = vmatprep.subr.bf16.mxu0 0
    %161 = vmatpush2.bf16.msra.mxu0 0
    %162 = vmatprep.subr.bf16.mxu0 0
    %163 = vmatpush2.bf16.msra.mxu0 0
    %164 = vmatprep.subr.bf16.mxu0 0
    %165 = vmatpush2.bf16.msra.mxu0 0
    %166 = vmatprep.subr.bf16.mxu0 0
    %167 = vmatpush2.bf16.msra.mxu0 0
    %168 = vmatprep.subr.bf16.mxu0 0
    %169 = vmatpush2.bf16.msra.mxu0 0
    %170 = vmatprep.mubr.bf16.mxu0 0
    %171 = vmatmul.mubr.bf16.gmra.mxu0 %v66
    %v172 = vpop.f32.mrf.mxu0
    %v173 = vadd.f32 %v88, %v172
    %v174 = vpop.f32.mrf.mxu0
    %v175 = vpop.f32.mrf.mxu0
    %v176 = vpop.f32.mrf.mxu0
    %177 = vdwg.mxu0
    %v178 = vmax.f32 %v173, 0.0
    %v179 = vld [vmem:[#allocation2] sm:$0xff]
    %v180 = vpack.c.bf16 %v178, %v178
    %v181 = vld [vmem:[#allocation8] sm:$0xf]
    %v182 = vld [vmem:[#allocation8 + $0x4] sm:$0xf]
    %v183 = vld [vmem:[#allocation8 + $0x8] sm:$0xf]
    %v184 = vld [vmem:[#allocation8 + $0xc] sm:$0xf]
    %v185 = vld [vmem:[#allocation8 + $0x10] sm:$0xf]
    %v186 = vld [vmem:[#allocation8 + $0x14] sm:$0xf]
    %v187 = vld [vmem:[#allocation8 + $0x18] sm:$0xf]
    %v188 = vld [vmem:[#allocation8 + $0x1c] sm:$0xf]
    %v189 = vld [vmem:[#allocation8 + $0x20] sm:$0xf]
    %v190 = vld [vmem:[#allocation8 + $0x24] sm:$0xf]
    %v191 = vld [vmem:[#allocation8 + $0x28] sm:$0xf]
    %v192 = vld [vmem:[#allocation8 + $0x2c] sm:$0xf]
    %v193 = vld [vmem:[#allocation8 + $0x30] sm:$0xf]
    %v194 = vld [vmem:[#allocation8 + $0x34] sm:$0xf]
    %v195 = vld [vmem:[#allocation8 + $0x38] sm:$0xf]
    %v196 = vld [vmem:[#allocation8 + $0x3c] sm:$0xf]
    %v213 = vunpack.c.l.b16 %v181
    %v214 = vunpack.c.l.b16 %v182
    %v215 = vunpack.c.l.b16 %v183
    %v216 = vunpack.c.l.b16 %v184
    %v217 = vunpack.c.l.b16 %v185
    %v218 = vunpack.c.l.b16 %v186
    %v219 = vunpack.c.l.b16 %v187
    %v220 = vunpack.c.l.b16 %v188
    %v221 = vunpack.c.l.b16 %v189
    %v222 = vunpack.c.l.b16 %v190
    %v223 = vunpack.c.l.b16 %v191
    %v224 = vunpack.c.l.b16 %v192
    %v225 = vunpack.c.l.b16 %v193
    %v226 = vunpack.c.l.b16 %v194
    %v227 = vunpack.c.l.b16 %v195
    %v228 = vunpack.c.l.b16 %v196
    %v229 = vpack.c.b16 %v214, %v213
    %v230 = vpack.c.b16 %v216, %v215
    %v231 = vpack.c.b16 %v218, %v217
    %v232 = vpack.c.b16 %v220, %v219
    %v233 = vpack.c.b16 %v222, %v221
    %v234 = vpack.c.b16 %v224, %v223
    %v235 = vpack.c.b16 %v226, %v225
    %v236 = vpack.c.b16 %v228, %v227
    %245 = vmatprep.subr.bf16.mxu0 0
    %246 = vmatpush1.bf16.msra.mxu0 %v236
    %247 = vmatprep.subr.bf16.mxu0 0
    %248 = vmatpush1.bf16.msra.mxu0 %v235
    %249 = vmatprep.subr.bf16.mxu0 0
    %250 = vmatpush1.bf16.msra.mxu0 %v234
    %251 = vmatprep.subr.bf16.mxu0 0
    %252 = vmatpush1.bf16.msra.mxu0 %v233
    %253 = vmatprep.subr.bf16.mxu0 0
    %254 = vmatpush1.bf16.msra.mxu0 %v232
    %255 = vmatprep.subr.bf16.mxu0 0
    %256 = vmatpush1.bf16.msra.mxu0 %v231
    %257 = vmatprep.subr.bf16.mxu0 0
    %258 = vmatpush1.bf16.msra.mxu0 %v230
    %259 = vmatprep.subr.bf16.mxu0 0
    %260 = vmatpush1.bf16.msra.mxu0 %v229
    %261 = vmatprep.subr.bf16.mxu0 0
    %262 = vmatpush2.bf16.msra.mxu0 0
    %263 = vmatprep.subr.bf16.mxu0 0
    %264 = vmatpush2.bf16.msra.mxu0 0
    %265 = vmatprep.subr.bf16.mxu0 0
    %266 = vmatpush2.bf16.msra.mxu0 0
    %267 = vmatprep.subr.bf16.mxu0 0
    %268 = vmatpush2.bf16.msra.mxu0 0
    %269 = vmatprep.subr.bf16.mxu0 0
    %270 = vmatpush2.bf16.msra.mxu0 0
    %271 = vmatprep.subr.bf16.mxu0 0
    %272 = vmatpush2.bf16.msra.mxu0 0
    %273 = vmatprep.subr.bf16.mxu0 0
    %274 = vmatpush2.bf16.msra.mxu0 0
    %275 = vmatprep.subr.bf16.mxu0 0
    %276 = vmatpush2.bf16.msra.mxu0 0
    %277 = vmatprep.mubr.bf16.mxu0 0
    %278 = vmatmul.mubr.bf16.gmra.mxu0 %v180
    %v279 = vpop.f32.mrf.mxu0
    %v280 = vadd.f32 0.0, %v279
    %v281 = vpop.f32.mrf.mxu0
    %v282 = vpop.f32.mrf.mxu0
    %v283 = vpop.f32.mrf.mxu0
    %284 = vdwg.mxu0
    %v285 = vadd.f32 %v179, %v280
    %286 = vst [vmem:[#allocation2] sm:$0xff] %v285
    // Predicated region
    $region38: #{tpu_custom_call.1} parent=1 // pred_check
      %p287 = pneg %p61
    $region39: #{tpu_custom_call.1} parent=1 // pred_check_branch
      %289 = sbr.rel (%p287) target = $region41
    $region40: #{tpu_custom_call.1} parent=1 // pred_region
      %v290 = vld [vmem:[#allocation2] sm:$0xff]
      %v291 = vld [vmem:[%s4] sm:$0x1]
      %v293 = vlaneseq
      %v294 = vshrl.u32 %v293, 7
      %v295 = vsub.s32 0, %v294
      %v296 = vrot.slane %v291, %v295
      %v298 = vadd.f32 %v290, %v296
      %299 = vst [vmem:[#allocation9] sm:$0xff] %v298
    $region41: #{tpu_custom_call.1} parent=1 // pred_fallthru
      _
    // Predicated region
    $region42: #{tpu_custom_call.1} parent=1 // pred_check
      _
    $region43: #{tpu_custom_call.1} parent=1 // pred_check_branch
      %301 = sbr.rel (0) target = $region45
    $region44: #{tpu_custom_call.1} parent=1 // pred_region
      %s303 = ssub.s32 128, 128
      %304 = vsyncadd [#allocation5], %s303
      %s306 = sshll.u32 [#allocation9], 4
      %s307 = int_to_ptr.vmem [resolvable:$true] %s306
      %309 = dma.vmem_to_hbm [thread:$0]  %s307, 128, %s5, [#allocation5]
    $region45: #{tpu_custom_call.1} parent=1 // pred_fallthru
      _
    // Predicated region
    $region46: #{tpu_custom_call.1} parent=1 // pred_check
      _
    $region47: #{tpu_custom_call.1} parent=1 // pred_check_branch
      %311 = sbr.rel (0) target = $region49
    $region48: #{tpu_custom_call.1} parent=1 // pred_region
      %312 = dma.done [#allocation5], 128
    $region49: #{tpu_custom_call.1} parent=1 // pred_fallthru
      _
    %313 = vsyncpa [#allocation4], 1
    %314 = vsyncpa [#allocation7], 1
    %315 = vsyncpa [#allocation5], 1

</llo_original>
